<compile_context>
chip_gen: v5e
topology: v5e:2x2
jax: 0.10.0
libtpu: 0.0.40
codegen_flags: <defaults>
</compile_context>

<pallas_src>
import jax
import jax.numpy as jnp
from jax.experimental import pallas as pl
from jax.experimental.pallas import tpu as pltpu

D = 512              # feature dim fixed by nn.Parameter(torch.randn(2, 512))
NUM_CLASSES = 2      # number of guidance embeddings
TN_DEFAULT = 4096    # rows/tile: 4096*512*4B = 8 MiB per f32 buffer (16 MiB dbl-buf)
VMEM_LIMIT_BYTES = 40 << 20   # fits all of v5e / v6e / v7x physical VMEM


def _round_up(x, m):
    return (x + m - 1) // m * m


def _sigmoid_prob_kernel(x_ref, gd_ref, o_ref):
    """softmax(100*x@gn.T)[:, 0] == sigmoid(x @ (100*(gn0-gn1)))  (scale pre-folded)."""
    x = x_ref[...]                                  # (TN, D), original dtype
    gd = gd_ref[...]                                # (1, D), already 100*(gn0-gn1)
    d = jax.lax.dot_general(                        # (TN, 1), f32 accumulation
        x, gd, (((1,), (1,)), ((), ())), preferred_element_type=jnp.float32)
    # exp on the EUP; approx reciprocal is a single EUP op in a free slot.
    o_ref[...] = pl.reciprocal(1.0 + jnp.exp(-d), approx=True)


def _logits_kernel(x_ref, gs_ref, o_ref):
    """Raw scaled similarities x @ (100*gn).T -> (TN, 2)  (scale pre-folded)."""
    o_ref[...] = jax.lax.dot_general(
        x_ref[...], gs_ref[...], (((1,), (1,)), ((), ())),
        preferred_element_type=jnp.float32)


def latent_vectors_learner_forward(tensor, guidance_embeddings, use_softmax=1,
                                   tile_rows=TN_DEFAULT):
    """JAX/Pallas equivalent of LatentVectorsLearner.forward.

    tensor:               (B, M, 512) float32 or bfloat16 (bf16 preferred on v7x)
    guidance_embeddings:  (2, 512)
    returns: (B*M,) float32 if use_softmax else (B*M, 2) float32
    """
    B, M, Dm = tensor.shape
    assert Dm == D and guidance_embeddings.shape == (NUM_CLASSES, D)
    N = B * M

    # The per-i PyTorch loop + torch.cat is just a flatten over (B, M).
    # Keep the input dtype through the DMA (bf16 input -> bf16 HBM reads).
    x = tensor.reshape(N, Dm)

    # One-time (4 KiB) guidance normalization, hoisted out of the kernel.
    g = guidance_embeddings.astype(jnp.float32)
    gn = g * jax.lax.rsqrt(jnp.sum(g * g, axis=-1, keepdims=True))   # (2, D)

    # Row tile: multiple of 8 sublanes; capped so the grid keeps >= ~4 steps
    # (pipelining + both v7x TensorCores busy). Ragged N handled by a partial
    # last block — no host-side padding / extra HBM copy.
    tn = max(8, min(_round_up(tile_rows, 8), _round_up(pl.cdiv(N, 4), 8)))
    grid = (pl.cdiv(N, tn),)
    x_bytes = N * Dm * x.dtype.itemsize
    cparams = pltpu.CompilerParams(
        dimension_semantics=("parallel",),
        vmem_limit_bytes=VMEM_LIMIT_BYTES)

    if use_softmax:
        # Fold scale + 2-class softmax into one D-vector projection.
        gd = (100.0 * (gn[0:1, :] - gn[1:2, :])).astype(x.dtype)     # (1, D)
        cost = pl.CostEstimate(
            flops=2 * N * Dm + 4 * N,
            transcendentals=N,
            bytes_accessed=x_bytes + Dm * gd.dtype.itemsize + N * 4)
        out = pl.pallas_call(
            _sigmoid_prob_kernel,
            out_shape=jax.ShapeDtypeStruct((N, 1), jnp.float32),
            grid=grid,
            in_specs=[
                pl.BlockSpec((tn, Dm), lambda i: (i, 0)),
                pl.BlockSpec((1, Dm), lambda i: (0, 0)),
            ],
            out_specs=pl.BlockSpec((tn, 1), lambda i: (i, 0)),
            compiler_params=cparams,
            cost_estimate=cost,
        )(x, gd)
        return out[:, 0]                                             # (B*M,)
    else:
        gs = (100.0 * gn).astype(x.dtype)                            # (2, D)
        cost = pl.CostEstimate(
            flops=2 * N * Dm * NUM_CLASSES,
            transcendentals=0,
            bytes_accessed=x_bytes + NUM_CLASSES * Dm * gs.dtype.itemsize
            + N * NUM_CLASSES * 4)
        out = pl.pallas_call(
            _logits_kernel,
            out_shape=jax.ShapeDtypeStruct((N, NUM_CLASSES), jnp.float32),
            grid=grid,
            in_specs=[
                pl.BlockSpec((tn, Dm), lambda i: (i, 0)),
                pl.BlockSpec((NUM_CLASSES, Dm), lambda i: (0, 0)),
            ],
            out_specs=pl.BlockSpec((tn, NUM_CLASSES), lambda i: (i, 0)),
            compiler_params=cparams,
            cost_estimate=cost,
        )(x, gs)
        return out                                                   # (B*M, 2)


def _reference_forward(tensor, g, use_softmax=1):
    # pure-JAX reference mirroring the PyTorch loop
    gf = g.astype(jnp.float32)
    nor = jnp.linalg.norm(gf, axis=-1, keepdims=True)
    gn = gf / nor
    chunks = []
    for i in range(tensor.shape[0]):
        sim = 100.0 * tensor[i].astype(jnp.float32) @ gn.T
        if use_softmax:
            chunks.append(jax.nn.softmax(sim, axis=-1)[:, 0])
        else:
            chunks.append(sim)
    return jnp.concatenate(chunks, axis=0)


if __name__ == "__main__":
    key = jax.random.PRNGKey(0)
    k_x, k_g, k_x2 = jax.random.split(key, 3)

    # deterministic stand-in for nn.Parameter(torch.randn(2, 512))
    guidance_embeddings = jax.random.normal(k_g, (NUM_CLASSES, D), dtype=jnp.float32)

    # ---- small shapes (two tiny tiles) -----------------------------------
    B, M = 2, 8
    tensor = jax.random.normal(k_x, (B, M, D), dtype=jnp.float32)

    probs = latent_vectors_learner_forward(tensor, guidance_embeddings, use_softmax=1)
    logits = latent_vectors_learner_forward(tensor, guidance_embeddings, use_softmax=0)
    jax.block_until_ready(probs)
    jax.block_until_ready(logits)

    ref_probs = _reference_forward(tensor, guidance_embeddings, use_softmax=1)
    ref_logits = _reference_forward(tensor, guidance_embeddings, use_softmax=0)

    assert probs.shape == (B * M,)
    assert logits.shape == (B * M, NUM_CLASSES)
    assert jnp.allclose(probs, ref_probs, atol=5e-3, rtol=2e-3)
    assert jnp.allclose(logits, ref_logits, atol=1e-2, rtol=1e-3)

    # ---- multi-tile + ragged-N path (N=500, tn=128 -> grid of 4, partial last block)
    B2, M2 = 2, 250
    tensor2 = jax.random.normal(k_x2, (B2, M2, D), dtype=jnp.float32)
    probs2 = latent_vectors_learner_forward(tensor2, guidance_embeddings,
                                            use_softmax=1, tile_rows=128)
    logits2 = latent_vectors_learner_forward(tensor2, guidance_embeddings,
                                             use_softmax=0, tile_rows=128)
    jax.block_until_ready(probs2)
    jax.block_until_ready(logits2)

    ref_probs2 = _reference_forward(tensor2, guidance_embeddings, use_softmax=1)
    ref_logits2 = _reference_forward(tensor2, guidance_embeddings, use_softmax=0)

    assert probs2.shape == (B2 * M2,)
    assert logits2.shape == (B2 * M2, NUM_CLASSES)
    assert jnp.allclose(probs2, ref_probs2, atol=5e-3, rtol=2e-3)
    assert jnp.allclose(logits2, ref_logits2, atol=1e-2, rtol=1e-3)

    # ---- bf16 pass-through smoke test (half HBM traffic path on v7x) ------
    # bf16 guidance quantization at 100x scale loosens numerics near the
    # decision boundary, so only structural checks here (f32 checked above).
    probs_bf = latent_vectors_learner_forward(tensor.astype(jnp.bfloat16),
                                              guidance_embeddings, use_softmax=1)
    jax.block_until_ready(probs_bf)
    assert probs_bf.shape == (B * M,)
    assert bool(jnp.all(jnp.isfinite(probs_bf)))
    assert bool(jnp.all((probs_bf >= 0.0) & (probs_bf <= 1.0)))

    print("KERNEL_OK")
</pallas_src>

<mosaic_0001>
module attributes {stable_mosaic.version = 11 : i64} {
  func.func @_sigmoid_prob_kernel(%arg0: i32, %arg1: memref<8x512xf32, #tpu.memory_space<vmem>>, %arg2: memref<1x512xf32, #tpu.memory_space<vmem>>, %arg3: memref<8x1xf32, #tpu.memory_space<vmem>>) attributes {dimension_semantics = [#tpu.dimension_semantics<parallel>], iteration_bounds = array<i64: 2>, scalar_prefetch = 0 : i64, scratch_operands = 0 : i64, tpu.core_type = #tpu.core_type<tc>, window_params = [{transform_indices = @transform_0, window_bounds = array<i64: 8, 512>}, {pipeline_mode = #tpu.pipeline_mode<synchronous>, transform_indices = @transform_1, window_bounds = array<i64: 1, 512>}, {transform_indices = @transform_2, window_bounds = array<i64: 8, 1>}]} {
    %c0 = arith.constant 0 : index
    %c0_0 = arith.constant 0 : index
    %0 = vector.load %arg1[%c0, %c0_0] : memref<8x512xf32, #tpu.memory_space<vmem>>, vector<8x512xf32>
    %c0_1 = arith.constant 0 : index
    %c0_2 = arith.constant 0 : index
    %1 = vector.load %arg2[%c0_1, %c0_2] : memref<1x512xf32, #tpu.memory_space<vmem>>, vector<1x512xf32>
    %cst = arith.constant dense<0.000000e+00> : vector<8x1xf32>
    %2 = tpu.matmul %0, %1, %cst {dimension_numbers = #tpu.dot_dimension_numbers<[1], [1], [0], [0], [0, 0, 1, 0], [], []>} : vector<8x512xf32>, vector<1x512xf32>, vector<8x1xf32> -> vector<8x1xf32>
    %cst_3 = arith.constant 0.000000e+00 : f32
    %3 = vector.broadcast %cst_3 : f32 to vector<8x1xf32>
    %4 = arith.subf %3, %2 : vector<8x1xf32>
    %5 = math.exp %4 : vector<8x1xf32>
    %cst_4 = arith.constant 1.000000e+00 : f32
    %6 = vector.broadcast %cst_4 : f32 to vector<8x1xf32>
    %7 = arith.addf %6, %5 : vector<8x1xf32>
    %8 = tpu.reciprocal %7 {approx = true} : vector<8x1xf32> -> vector<8x1xf32>
    %c0_5 = arith.constant 0 : index
    %c0_6 = arith.constant 0 : index
    %9 = vector.load %arg3[%c0_5, %c0_6] : memref<8x1xf32, #tpu.memory_space<vmem>>, vector<8x1xf32>
    tpu.vector_store %arg3[%c0_5, %c0_6], %8 {strides = array<i32>} : memref<8x1xf32, #tpu.memory_space<vmem>>, vector<8x1xf32>,
    return
  }
  func.func @transform_0(%arg0: i32) -> (i32, i32) {
    %c0_i32 = arith.constant 0 : i32
    %c0_i32_0 = arith.constant 0 : i32
    return %arg0, %c0_i32 : i32, i32
  }
  func.func @transform_1(%arg0: i32) -> (i32, i32) {
    %c0_i32 = arith.constant 0 : i32
    %c0_i32_0 = arith.constant 0 : i32
    %c0_i32_1 = arith.constant 0 : i32
    return %c0_i32, %c0_i32_0 : i32, i32
  }
  func.func @transform_2(%arg0: i32) -> (i32, i32) {
    %c0_i32 = arith.constant 0 : i32
    %c0_i32_0 = arith.constant 0 : i32
    return %arg0, %c0_i32 : i32, i32
  }
}

</mosaic_0001>

<llo_original>
// kernel: tpu_custom_call.1
$region0: #{tpu_custom_call.1}
  #allocation0 [shape = 'u32[]', space=smem, size = 0x4, offset = 0x4, fixed_abs, tag = 'smem constant byte address 0x4 - core index']
  #allocation1 [shape = 'u32[72,128]{1,0:T(1,128)}', space=vmem, size = 0x9000, scoped, tag = 'internal scratch']
  %s0 = inlined_call_operand.hbm [shape: f32[16,512], index: 0, kind: input, shape index: {}]
  %s1 = inlined_call_operand.hbm [shape: f32[1,512], index: 1, kind: input, shape index: {}]
  %s2 = inlined_call_operand.vmem [shape: f32[16,1], index: 2, kind: output, shape index: {}]
  %s3 = sld [smem:[#allocation0]]
  $region49: #{tpu_custom_call.1} parent=0
    _
  %s5 = ssub.s32 1, %s3
  %s6 = scalar_select 0, %s5, %s3
  $region1: #{tpu_custom_call.1} parent=0
    #allocation2 [shape = 'u8[32768]{0}', space=vmem, size = 0x8000, scoped, tag = 'input window, operand 0']
    #allocation3 [shape = 's32[2]{0}', space=sflag, size = 0x8, scoped, tag = 'scoped memory for tpu_custom_call.1']
    #allocation4 [shape = 'u8[2048]{0}', space=vmem, size = 0x800, scoped, tag = 'input window, operand 1, single buffered']
    #allocation5 [shape = 's32[1]{0}', space=sflag, size = 0x4, scoped, tag = 'scoped memory for tpu_custom_call.1']
    %7 = vsyncpa [#allocation3], 0
    %s8 = scalar_lea.sflag [#allocation3], 1
    %9 = vsyncpa %s8, 0
    %10 = vsyncpa [#allocation5], 0
    loop: start=0, step=1, limit=4
    $region2: #{tpu_custom_call.1} parent=1 // loop_pre_header
      _
    $region3: #{tpu_custom_call.1} parent=1 // loop_header
      %s12 = sphi 0, %s16
      %p13 = scmp.ge.s32.totalorder %s12, 4
      %s22 = sphi 0, %s24
      %s25 = sphi 0, %s22
      %s26 = sphi 0, %s25
      %s42 = sphi 0, %s26
      %s46 = sphi 0, %s46
      %s48 = sphi 0, %s46
      %s49 = sphi 0, %s48
      %s63 = sphi 0, %s49
      %s69 = sphi 0, %s71
      %s72 = sphi 0, %s69
      %s73 = sphi 0, %s72
      %s89 = sphi 0, %s73
    $region4: #{tpu_custom_call.1} parent=1 // loop_header_branch
      %15 = sbr.rel (%p13) target = $region8
    $region5: #{tpu_custom_call.1} parent=1 // loop_body
      %s17 = ssub.s32 %s12, 1
      %s18 = ssub.s32 %s12, 2
      %s19 = sadd.s32 %s12, 1
      %s20 = ssub.s32 %s12, %s19
      %p21 = scmp.eq.s32.totalorder %s20, 0
      %s23 = sadd.s32 %s22, 1
      %s24 = scalar_select %p21, %s22, %s23
      %p27 = pneg %p21
      %p28 = scmp.eq.s32.totalorder %s12, 1
      %p29 = por %p27, %p28
      %p30 = scmp.ne.s32.totalorder %s22, %s25
      %p31 = scmp.eq.s32.totalorder %s12, 0
      %p32 = por %p30, %p31
      %p33 = scmp.ne.s32.totalorder %s22, %s25
      %p34 = scmp.eq.s32.totalorder %s17, 1
      %p35 = por %p33, %p34
      %p36 = scmp.ne.s32.totalorder %s25, %s26
      %p37 = scmp.eq.s32.totalorder %s17, 0
      %p38 = por %p36, %p37
      %p39 = scmp.ne.s32.totalorder %s25, %s26
      %p40 = scmp.eq.s32.totalorder %s18, 1
      %p41 = por %p39, %p40
      %p43 = scmp.ne.s32.totalorder %s26, %s42
      %p44 = scmp.eq.s32.totalorder %s18, 0
      %p45 = por %p43, %p44
      %s47 = sadd.s32 %s46, 1
      %p50 = scmp.eq.s32.totalorder %s12, 1
      %p51 = scmp.ne.s32.totalorder %s46, %s48
      %p52 = scmp.eq.s32.totalorder %s12, 0
      %p53 = por %p51, %p52
      %p54 = scmp.ne.s32.totalorder %s46, %s48
      %p55 = scmp.eq.s32.totalorder %s17, 1
      %p56 = por %p54, %p55
      %p57 = scmp.ne.s32.totalorder %s48, %s49
      %p58 = scmp.eq.s32.totalorder %s17, 0
      %p59 = por %p57, %p58
      %p60 = scmp.ne.s32.totalorder %s48, %s49
      %p61 = scmp.eq.s32.totalorder %s18, 1
      %p62 = por %p60, %p61
      %p64 = scmp.ne.s32.totalorder %s49, %s63
      %p65 = scmp.eq.s32.totalorder %s18, 0
      %p66 = por %p64, %p65
      %s67 = ssub.s32 %s12, %s19
      %p68 = scmp.eq.s32.totalorder %s67, 0
      %s70 = sadd.s32 %s69, 1
      %s71 = scalar_select %p68, %s69, %s70
      %p74 = pneg %p68
      %p75 = scmp.eq.s32.totalorder %s12, 1
      %p76 = por %p74, %p75
      %p77 = scmp.ne.s32.totalorder %s69, %s72
      %p78 = scmp.eq.s32.totalorder %s12, 0
      %p79 = por %p77, %p78
      %p80 = scmp.ne.s32.totalorder %s69, %s72
      %p81 = scmp.eq.s32.totalorder %s17, 1
      %p82 = por %p80, %p81
      %p83 = scmp.ne.s32.totalorder %s72, %s73
      %p84 = scmp.eq.s32.totalorder %s17, 0
      %p85 = por %p83, %p84
      %p86 = scmp.ne.s32.totalorder %s72, %s73
      %p87 = scmp.eq.s32.totalorder %s18, 1
      %p88 = por %p86, %p87
      %p90 = scmp.ne.s32.totalorder %s73, %s89
      %p91 = scmp.eq.s32.totalorder %s18, 0
      %p92 = por %p90, %p91
      %p93 = scmp.le.s32.totalorder 1, %s12
      %p94 = scmp.lt.s32.totalorder %s12, 3
      %p95 = pnand %p93, %p94
      %p96 = pneg %p95
      // Predicated region
      $region9: #{tpu_custom_call.1} parent=5 // pred_check
        _
      $region10: #{tpu_custom_call.1} parent=5 // pred_check_branch
        %98 = sbr.rel (%p95) target = $region12
      $region11: #{tpu_custom_call.1} parent=5 // pred_region
        %s99 = ssub.s32 %s12, 1
        // Predicated region
        $region13: #{tpu_custom_call.1} parent=11 // pred_check
          %p100 = pneg %p59
        $region14: #{tpu_custom_call.1} parent=11 // pred_check_branch
          %102 = sbr.rel (%p100) target = $region16
        $region15: #{tpu_custom_call.1} parent=11 // pred_region
          %104 = vsyncadd [#allocation5], 0
          %s106 = sshll.u32 %s1, 4
          %s107 = int_to_ptr.hbm [resolvable:$true] %s106
          %s108 = sshll.u32 [#allocation4], 4
          %s109 = int_to_ptr.vmem [resolvable:$true] %s108
          %111 = dma.hbm_to_vmem [thread:$0]  %s107, 64, %s109, [#allocation5]
        $region16: #{tpu_custom_call.1} parent=11 // pred_fallthru
          _
      $region12: #{tpu_custom_call.1} parent=5 // pred_fallthru
        _
      %p112 = scmp.lt.s32.totalorder %s12, 2
      // Predicated region
      $region17: #{tpu_custom_call.1} parent=5 // pred_check
        %p113 = pneg %p112
      $region18: #{tpu_custom_call.1} parent=5 // pred_check_branch
        %115 = sbr.rel (%p113) target = $region20
      $region19: #{tpu_custom_call.1} parent=5 // pred_region
        // Predicated region
        $region21: #{tpu_custom_call.1} parent=19 // pred_check
          %p116 = pneg %p32
        $region22: #{tpu_custom_call.1} parent=19 // pred_check_branch
          %118 = sbr.rel (%p116) target = $region24
        $region23: #{tpu_custom_call.1} parent=19 // pred_region
          %s119 = sand.u32 %s22, 1
          %s120 = scalar_lea.sflag [#allocation3], %s119
          %s121 = sand.u32 %s22, 1
          %s122 = smul.addr %s121, 32
          %s123 = scalar_lea.vmem [#allocation2], %s122
          %125 = vsyncadd %s120, 0
          %s126 = smul.addr %s12, 4
          %s127 = smul.addr %s126, 8
          %s128 = scalar_lea.hbm %s0, %s127
          %s130 = sshll.u32 %s128, 4
          %s131 = int_to_ptr.hbm [resolvable:$true] %s130
          %s132 = sshll.u32 %s123, 4
          %s133 = int_to_ptr.vmem [resolvable:$true] %s132
          %135 = dma.hbm_to_vmem [thread:$0]  %s131, 512, %s133, %s120
        $region24: #{tpu_custom_call.1} parent=19 // pred_fallthru
          _
      $region20: #{tpu_custom_call.1} parent=5 // pred_fallthru
        _
      %p136 = scmp.le.s32.totalorder 1, %s12
      %p137 = scmp.lt.s32.totalorder %s12, 3
      %p138 = pnand %p136, %p137
      %p139 = pneg %p138
      // Predicated region
      $region25: #{tpu_custom_call.1} parent=5 // pred_check
        _
      $region26: #{tpu_custom_call.1} parent=5 // pred_check_branch
        %141 = sbr.rel (%p138) target = $region28
      $region27: #{tpu_custom_call.1} parent=5 // pred_region
        %s142 = ssub.s32 %s12, 1
        %s143 = sand.u32 %s25, 1
        %s144 = scalar_lea.sflag [#allocation3], %s143
        %s145 = sand.u32 %s25, 1
        %s146 = smul.addr %s145, 32
        %s147 = scalar_lea.vmem [#allocation2], %s146
        // Predicated region
        $region29: #{tpu_custom_call.1} parent=27 // pred_check
          %p148 = pneg %p38
        $region30: #{tpu_custom_call.1} parent=27 // pred_check_branch
          %150 = sbr.rel (%p148) target = $region32
        $region31: #{tpu_custom_call.1} parent=27 // pred_region
          %152 = dma.done %s144, 512
        $region32: #{tpu_custom_call.1} parent=27 // pred_fallthru
          _
        // Predicated region
        $region33: #{tpu_custom_call.1} parent=27 // pred_check
          %p153 = pneg %p59
        $region34: #{tpu_custom_call.1} parent=27 // pred_check_branch
          %155 = sbr.rel (%p153) target = $region36
        $region35: #{tpu_custom_call.1} parent=27 // pred_region
          %157 = dma.done [#allocation5], 64
        $region36: #{tpu_custom_call.1} parent=27 // pred_fallthru
          _
        %s158 = sand.u32 %s25, 1
        %s159 = scalar_lea.sflag [#allocation3], %s158
        %s160 = sand.u32 %s25, 1
        %s161 = smul.addr %s160, 32
        %s162 = scalar_lea.vmem [#allocation2], %s161
        %p163 = pneg %p38
        %p164 = pneg %p35
        %p165 = pneg %p59
        %p166 = pneg %p56
        %p167 = pneg %p85
        %p168 = pneg %p82
        %p169 = scmp.lt.s32.totalorder %s17, 1
        %s170 = scalar_select %p169, %s17, 1
        %s171 = smul.addr %s170, 8
        %s172 = scalar_lea.vmem %s2, %s171
        %p173 = scmp.lt.s32.totalorder %s17, 1
        %s174 = scalar_select %p173, %s17, 1
        %s175 = smul.addr %s174, 8
        %s176 = scalar_lea.vmem %s2, %s175
        %v177 = vld [vmem:[%s147] sm:$0xff]
        %v178 = vld [vmem:[%s147 + $0x8] sm:$0xff]
        %v179 = vld [vmem:[%s147 + $0x10] sm:$0xff]
        %v180 = vld [vmem:[%s147 + $0x18] sm:$0xff]
        %v181 = vld [vmem:[#allocation4] sm:$0xf]
        %v183 = vperm.slane %v181, 0
        %v184 = vperm.slane %v181, 1
        %v185 = vperm.slane %v181, 2
        %v186 = vperm.slane %v181, 3
        %v191 = vmul.f32 %v177, %v183
        %v192 = vmul.f32 %v178, %v184
        %v193 = vmul.f32 %v179, %v185
        %v194 = vmul.f32 %v180, %v186
        %v195 = vadd.f32 %v191, %v192
        %v196 = vadd.f32 %v195, %v193
        %v197 = vadd.f32 %v196, %v194
        %198 = vadd.xlane.f32.xlu0 %v197
        %v199 = vpop.xlane.xlu0 %198
        %v200 = vsub.f32 0.0, %v199
        %v201 = vmul.f32 %v200, 1.442695
        %v202 = vpow.pop %v201
        %v203 = vadd.f32 %v202, 1.0
        %v204 = vrcp.pop %v203
        %vm205 = vcmask 7168
        %206 = vst.msk [vmem:[%s176] sm:$0xff] %vm205, %v204
        %p207 = scmp.lt.s32.totalorder %s17, 1
        %s208 = scalar_select %p207, %s17, 1
        %s209 = smul.addr %s208, 8
        %s210 = scalar_lea.vmem %s2, %s209
        // Predicated region
        $region37: #{tpu_custom_call.1} parent=27 // pred_check
          %p211 = pneg %p82
        $region38: #{tpu_custom_call.1} parent=27 // pred_check_branch
          %213 = sbr.rel (%p211) target = $region40
        $region39: #{tpu_custom_call.1} parent=27 // pred_region
          _
        $region40: #{tpu_custom_call.1} parent=27 // pred_fallthru
          _
      $region28: #{tpu_custom_call.1} parent=5 // pred_fallthru
        _
      %p214 = scmp.le.s32.totalorder 2, %s12
      // Predicated region
      $region41: #{tpu_custom_call.1} parent=5 // pred_check
        %p215 = pneg %p214
      $region42: #{tpu_custom_call.1} parent=5 // pred_check_branch
        %217 = sbr.rel (%p215) target = $region44
      $region43: #{tpu_custom_call.1} parent=5 // pred_region
        %s218 = ssub.s32 %s12, 2
        // Predicated region
        $region45: #{tpu_custom_call.1} parent=43 // pred_check
          %p219 = pneg %p88
        $region46: #{tpu_custom_call.1} parent=43 // pred_check_branch
          %221 = sbr.rel (%p219) target = $region48
        $region47: #{tpu_custom_call.1} parent=43 // pred_region
          %p222 = scmp.lt.s32.totalorder %s18, 1
          %s223 = scalar_select %p222, %s18, 1
          %s224 = smul.addr %s223, 8
          %s225 = scalar_lea.vmem %s2, %s224
        $region48: #{tpu_custom_call.1} parent=43 // pred_fallthru
          _
      $region44: #{tpu_custom_call.1} parent=5 // pred_fallthru
        _
    $region6: #{tpu_custom_call.1} parent=1 // loop_footer
      %s16 = sadd.s32 1, %s12
    $region7: #{tpu_custom_call.1} parent=1 // loop_footer_branch
      %11 = sbr.rel target = $region3
    $region8: #{tpu_custom_call.1} parent=1 // loop_exit
      _
    %226 = vsyncpa [#allocation3], 1
    %s227 = scalar_lea.sflag [#allocation3], 1
    %228 = vsyncpa %s227, 1
    %229 = vsyncpa [#allocation5], 1

</llo_original>
